<compile_context>
chip_gen: v6e
topology: v6e:2x2x1
jax: 0.10.0
libtpu: 0.0.40
codegen_flags: <defaults>
</compile_context>

<pallas_src>
import math
import functools

import jax
import jax.numpy as jnp
from jax import lax
from jax.experimental import pallas as pl
from jax.experimental.pallas import tpu as pltpu


_EPS = 1e-12  # torch.nn.functional.normalize default eps


def _round_up(x, m):
    return ((x + m - 1) // m) * m


# ---------------------------------------------------------------------------
# Kernel bodies
# ---------------------------------------------------------------------------

def _row_l2norm_kernel(x_ref, o_ref):
    """Row-wise L2 normalization of a (TR, D) tile."""
    x = x_ref[...].astype(jnp.float32)
    sumsq = jnp.sum(x * x, axis=-1, keepdims=True)
    # x / max(||x||, eps) == x * rsqrt(max(||x||^2, eps^2))  (sqrt monotone;
    # 1e-24 is a normal f32).  rsqrt -> EUP slot, mul -> VPU: nearly free.
    inv = lax.rsqrt(jnp.maximum(sumsq, _EPS * _EPS))
    o_ref[...] = (x * inv).astype(o_ref.dtype)


def _arcface_dense_kernel(xn_ref, wn_ref, lbl_ref, o_ref, *,
                          cos_m, sin_m, th, mm, s, easy_margin):
    """Training path with a dense (possibly soft) label tile (TB, TO)."""
    cosine = lax.dot_general(
        xn_ref[...], wn_ref[...],
        dimension_numbers=(((1,), (1,)), ((), ())),   # contract on D, no .T
        preferred_element_type=jnp.float32)
    lbl = lbl_ref[...].astype(jnp.float32)
    sine = jnp.sqrt(jnp.clip(1.0 - cosine * cosine, 0.0, 1.0))
    phi = cosine * cos_m - sine * sin_m
    if easy_margin:
        phi = jnp.where(cosine > 0.0, phi, cosine)
    else:
        phi = jnp.where(cosine > th, phi, cosine - mm)
    # lbl * phi + (1 - lbl) * cosine  ==  cosine + lbl * (phi - cosine)
    out = cosine + lbl * (phi - cosine)
    o_ref[...] = (s * out).astype(o_ref.dtype)


def _arcface_idx_kernel(xn_ref, wn_ref, idx_ref, o_ref, *,
                        cos_m, sin_m, th, mm, s, easy_margin):
    """Training path with hard labels given as int32 indices (TB, 1).

    The margin (sqrt / where) is only evaluated on the gathered target cosine
    per row, not over the whole (TB, TO) tile.
    """
    j = pl.program_id(1)
    cosine = lax.dot_general(
        xn_ref[...], wn_ref[...],
        dimension_numbers=(((1,), (1,)), ((), ())),
        preferred_element_type=jnp.float32)
    tb, to = cosine.shape
    cols = lax.broadcasted_iota(jnp.int32, (tb, to), 1) + j * to
    mask = cols == idx_ref[...]                                  # (TB, TO)
    # Gather the target-column cosine for each row (0 if target not in tile).
    cos_t = jnp.sum(jnp.where(mask, cosine, 0.0), axis=-1, keepdims=True)
    sine_t = jnp.sqrt(jnp.clip(1.0 - cos_t * cos_t, 0.0, 1.0))
    phi_t = cos_t * cos_m - sine_t * sin_m
    if easy_margin:
        phi_t = jnp.where(cos_t > 0.0, phi_t, cos_t)
    else:
        phi_t = jnp.where(cos_t > th, phi_t, cos_t - mm)
    out = cosine + jnp.where(mask, phi_t - cos_t, 0.0)
    o_ref[...] = (s * out).astype(o_ref.dtype)


def _cosine_kernel(xn_ref, wn_ref, o_ref, *, scale):
    """Eval / non-metrics paths: (optionally scaled) cosine similarity."""
    cosine = lax.dot_general(
        xn_ref[...], wn_ref[...],
        dimension_numbers=(((1,), (1,)), ((), ())),
        preferred_element_type=jnp.float32)
    o_ref[...] = (scale * cosine).astype(o_ref.dtype)


# ---------------------------------------------------------------------------
# pallas_call wrappers (tiling, padding, grid)
# ---------------------------------------------------------------------------

def l2_normalize_rows(x, out_dtype=jnp.float32, row_tile=256):
    """Row-normalize a [R, D] matrix with a 1-D grid over row tiles."""
    R, D = x.shape
    tr = min(row_tile, _round_up(R, 8))
    rp = _round_up(R, tr)
    xp = jnp.pad(x, ((0, rp - R), (0, 0))) if rp != R else x
    out = pl.pallas_call(
        _row_l2norm_kernel,
        out_shape=jax.ShapeDtypeStruct((rp, D), out_dtype),
        grid=(rp // tr,),
        in_specs=[pl.BlockSpec((tr, D), lambda i: (i, 0))],
        out_specs=pl.BlockSpec((tr, D), lambda i: (i, 0)),
        compiler_params=pltpu.CompilerParams(
            dimension_semantics=("parallel",)),
    )(xp)
    return out[:R] if rp != R else out


def _tile_sizes(B, O, block_b, block_o):
    # Batch tile: multiple of 8 (sublane); class tile: multiple of 128 (lane-
    # dense output stores). Defaults (256, 512) keep double-buffered tiles
    # well inside the 32 MiB default scoped VMEM even on v7x (64 MiB part).
    tb = min(block_b, _round_up(B, 8))
    to = min(block_o, _round_up(O, 128))
    return tb, to, _round_up(B, tb), _round_up(O, to)


def _pad_rows(x, rows):
    return jnp.pad(x, ((0, rows - x.shape[0]), (0, 0))) if rows != x.shape[0] else x


def _matmul_call(kernel, xn, wn, extra, extra_spec_fn, *,
                 out_dtype, block_b, block_o):
    B, D = xn.shape
    O = wn.shape[0]
    tb, to, bp, op = _tile_sizes(B, O, block_b, block_o)
    xn_p = _pad_rows(xn, bp)
    wn_p = _pad_rows(wn, op)
    in_arrays = [xn_p, wn_p]
    in_specs = [pl.BlockSpec((tb, D), lambda i, j: (i, 0)),
                pl.BlockSpec((to, D), lambda i, j: (j, 0))]
    if extra is not None:
        in_arrays.append(extra(bp, op))
        in_specs.append(extra_spec_fn(tb, to))
    out = pl.pallas_call(
        kernel,
        out_shape=jax.ShapeDtypeStruct((bp, op), out_dtype),
        grid=(bp // tb, op // to),
        in_specs=in_specs,
        out_specs=pl.BlockSpec((tb, to), lambda i, j: (i, j)),
        compiler_params=pltpu.CompilerParams(
            dimension_semantics=("parallel", "parallel")),
    )(*in_arrays)
    return out[:B, :O]


def arcface_train_dense(xn, wn, label, *, cos_m, sin_m, th, mm, s,
                        easy_margin=False, out_dtype=jnp.float32,
                        block_b=256, block_o=512):
    kernel = functools.partial(_arcface_dense_kernel, cos_m=cos_m, sin_m=sin_m,
                               th=th, mm=mm, s=s, easy_margin=easy_margin)
    B, O = label.shape
    extra = lambda bp, op: (jnp.pad(label, ((0, bp - B), (0, op - O)))
                            if (bp, op) != (B, O) else label)
    extra_spec = lambda tb, to: pl.BlockSpec((tb, to), lambda i, j: (i, j))
    return _matmul_call(kernel, xn, wn, extra, extra_spec,
                        out_dtype=out_dtype, block_b=block_b, block_o=block_o)


def arcface_train_idx(xn, wn, label_idx, *, cos_m, sin_m, th, mm, s,
                      easy_margin=False, out_dtype=jnp.float32,
                      block_b=256, block_o=512):
    kernel = functools.partial(_arcface_idx_kernel, cos_m=cos_m, sin_m=sin_m,
                               th=th, mm=mm, s=s, easy_margin=easy_margin)
    B = label_idx.shape[0]
    idx2d = label_idx.astype(jnp.int32).reshape(B, 1)
    extra = lambda bp, op: (jnp.pad(idx2d, ((0, bp - B), (0, 0)),
                                    constant_values=-1)
                            if bp != B else idx2d)
    extra_spec = lambda tb, to: pl.BlockSpec((tb, 1), lambda i, j: (i, 0))
    return _matmul_call(kernel, xn, wn, extra, extra_spec,
                        out_dtype=out_dtype, block_b=block_b, block_o=block_o)


def cosine_scaled(xn, wn, *, scale, out_dtype=jnp.float32,
                  block_b=256, block_o=512):
    kernel = functools.partial(_cosine_kernel, scale=scale)
    return _matmul_call(kernel, xn, wn, None, None,
                        out_dtype=out_dtype, block_b=block_b, block_o=block_o)


# ---------------------------------------------------------------------------
# ArcFace module (param init / step schedule stays plain Python/JAX)
# ---------------------------------------------------------------------------

def _xavier_uniform(key, out_features, in_features):
    bound = math.sqrt(6.0 / (in_features + out_features))
    return jax.random.uniform(key, (out_features, in_features),
                              dtype=jnp.float32, minval=-bound, maxval=bound)


class ArcFace:
    def __init__(self, in_features, out_features, params, total_steps,
                 easy_margin=False, key=None, compute_dtype=jnp.float32,
                 block_b=256, block_o=512):
        self.in_features = in_features
        self.out_features = out_features
        self.params = list(params.values())
        step_params = []
        if total_steps is not None:
            for param in self.params:
                steps = int(total_steps * param['ratio'])
                step_params.extend([param] * steps)
            if len(step_params) < total_steps + 1:
                step_params.extend([self.params[-1]] *
                                   (total_steps + 1 - len(step_params)))
        else:
            step_params = self.params
        self.step_params = step_params
        self.current_param_idx = -1
        self.step()

        if key is None:
            key = jax.random.PRNGKey(0)
        k1, k2 = jax.random.split(key)
        self.weight = _xavier_uniform(k1, out_features, in_features)
        self.weight2 = _xavier_uniform(k2, out_features, in_features)

        self.easy_margin = easy_margin
        self.cos_0 = math.cos(0)
        self.sin_0 = math.sin(0)
        self.th_0 = math.cos(math.pi - 0)
        self.mm_0 = math.sin(math.pi - 0) * 0

        # jnp.bfloat16 halves MXU-operand VMEM + doubles MXU throughput on
        # v6e/v7x (f32 accumulation kept); default f32 matches torch exactly.
        self.compute_dtype = compute_dtype
        self.block_b = block_b
        self.block_o = block_o
        self.training = True

    def set_params(self, s, m):
        self.s = s
        self.m = m
        self.cos_m = math.cos(m)
        self.sin_m = math.sin(m)
        self.th = math.cos(math.pi - m)
        self.mm = math.sin(math.pi - m) * m

    def step(self):
        self.current_param_idx += 1
        p = self.step_params[self.current_param_idx]
        self.set_params(s=p['s'], m=p['m'])

    def train(self):
        self.training = True
        return self

    def eval(self):
        self.training = False
        return self

    def forward(self, input, label=None, metrics_learning=True):
        cd = self.compute_dtype
        tiles = dict(block_b=self.block_b, block_o=self.block_o)
        if self.training:
            if metrics_learning:
                xn = l2_normalize_rows(input, out_dtype=cd)
                wn = l2_normalize_rows(self.weight, out_dtype=cd)
                margin = dict(cos_m=self.cos_m, sin_m=self.sin_m, th=self.th,
                              mm=self.mm, s=self.s,
                              easy_margin=self.easy_margin, **tiles)
                if label.ndim == 1:
                    # hard labels as class indices -> fast path (no [B, O]
                    # one-hot stream; margin only at the target column)
                    return arcface_train_idx(xn, wn, label, **margin)
                # dense (possibly soft) labels -> exact original semantics
                return arcface_train_dense(xn, wn, label, **margin)
            xn = l2_normalize_rows(input, out_dtype=cd)
            wn = l2_normalize_rows(self.weight2, out_dtype=cd)
            return cosine_scaled(xn, wn, scale=1.0, **tiles)
        elif metrics_learning:
            xn = l2_normalize_rows(input, out_dtype=cd)
            wn = l2_normalize_rows(self.weight, out_dtype=cd)
            return cosine_scaled(xn, wn, scale=self.s, **tiles)
        else:
            xn = l2_normalize_rows(input, out_dtype=cd)
            wn = l2_normalize_rows(self.weight2, out_dtype=cd)
            return cosine_scaled(xn, wn, scale=1.0, **tiles)

    __call__ = forward


# ---------------------------------------------------------------------------
# Pure-JAX references for verification
# ---------------------------------------------------------------------------

def _ref_normalize(x):
    return x / jnp.maximum(jnp.linalg.norm(x, axis=-1, keepdims=True), _EPS)


def _ref_forward_train(x, w, label, cos_m, sin_m, th, mm, s, easy_margin):
    cosine = _ref_normalize(x) @ _ref_normalize(w).T
    sine = jnp.sqrt(jnp.clip(1.0 - cosine ** 2, 0.0, 1.0))
    phi = cosine * cos_m - sine * sin_m
    if easy_margin:
        phi = jnp.where(cosine > 0.0, phi, cosine)
    else:
        phi = jnp.where(cosine > th, phi, cosine - mm)
    return s * (label * phi + (1.0 - label) * cosine)


if __name__ == "__main__":
    key = jax.random.PRNGKey(0)
    k_w, k_x, k_lbl = jax.random.split(key, 3)

    B, D, O = 8, 32, 64  # small demo shapes

    arc_params = {
        "stage0": {"s": 30.0, "m": 0.30, "ratio": 0.5},
        "stage1": {"s": 30.0, "m": 0.50, "ratio": 0.5},
    }
    model = ArcFace(in_features=D, out_features=O, params=arc_params,
                    total_steps=10, easy_margin=False, key=k_w)

    x = jax.random.normal(k_x, (B, D), dtype=jnp.float32)
    label_idx = jax.random.randint(k_lbl, (B,), 0, O)
    label = jax.nn.one_hot(label_idx, O, dtype=jnp.float32)

    ref_train = _ref_forward_train(x, model.weight, label,
                                   model.cos_m, model.sin_m,
                                   model.th, model.mm, model.s, False)

    # training + metrics_learning, dense (one-hot / soft) label path
    out_dense = model.forward(x, label, metrics_learning=True)
    jax.block_until_ready(out_dense)
    assert out_dense.shape == (B, O)
    assert jnp.allclose(out_dense, ref_train, atol=1e-3, rtol=1e-3)

    # training + metrics_learning, hard-label index fast path
    out_idx = model.forward(x, label_idx, metrics_learning=True)
    jax.block_until_ready(out_idx)
    assert jnp.allclose(out_idx, ref_train, atol=1e-3, rtol=1e-3)

    # eval + metrics_learning (scaled cosine vs weight)
    model.eval()
    out_eval = model.forward(x, label, metrics_learning=True)
    jax.block_until_ready(out_eval)
    ref_eval = model.s * (_ref_normalize(x) @ _ref_normalize(model.weight).T)
    assert jnp.allclose(out_eval, ref_eval, atol=1e-3, rtol=1e-3)

    # non-metrics path (plain cosine vs weight2)
    out_nm = model.forward(x, label, metrics_learning=False)
    jax.block_until_ready(out_nm)
    ref_nm = _ref_normalize(x) @ _ref_normalize(model.weight2).T
    assert jnp.allclose(out_nm, ref_nm, atol=1e-3, rtol=1e-3)

    # bf16 MXU-operand option (v6e/v7x): f32 accumulation, loose tolerance
    model.train()
    model.compute_dtype = jnp.bfloat16
    out_bf16 = model.forward(x, label_idx, metrics_learning=True)
    jax.block_until_ready(out_bf16)
    assert bool(jnp.all(jnp.isfinite(out_bf16)))
    assert jnp.allclose(out_bf16, ref_train, atol=1.0)

    print("KERNEL_OK")
</pallas_src>

<mosaic_0001>
module attributes {stable_mosaic.version = 11 : i64} {
  func.func @_row_l2norm_kernel(%arg0: i32, %arg1: memref<8x32xf32, #tpu.memory_space<vmem>>, %arg2: memref<8x32xf32, #tpu.memory_space<vmem>>) attributes {dimension_semantics = [#tpu.dimension_semantics<parallel>], iteration_bounds = array<i64: 1>, scalar_prefetch = 0 : i64, scratch_operands = 0 : i64, tpu.core_type = #tpu.core_type<tc>, window_params = [{transform_indices = @transform_0, window_bounds = array<i64: 8, 32>}, {transform_indices = @transform_1, window_bounds = array<i64: 8, 32>}]} {
    %c0 = arith.constant 0 : index
    %c0_0 = arith.constant 0 : index
    %0 = vector.load %arg1[%c0, %c0_0] : memref<8x32xf32, #tpu.memory_space<vmem>>, vector<8x32xf32>
    %1 = arith.mulf %0, %0 : vector<8x32xf32>
    %cst = arith.constant dense<0.000000e+00> : vector<8xf32>
    %2 = vector.multi_reduction <add>, %1, %cst [1] : vector<8x32xf32> to vector<8xf32>
    %3 = vector.shape_cast %2 : vector<8xf32> to vector<8x1xf32>
    %cst_1 = arith.constant 1.000000e-24 : f32
    %4 = vector.broadcast %cst_1 : f32 to vector<8x1xf32>
    %5 = arith.maximumf %3, %4 : vector<8x1xf32>
    %6 = math.rsqrt %5 : vector<8x1xf32>
    %7 = vector.broadcast %6 : vector<8x1xf32> to vector<8x32xf32>
    %8 = arith.mulf %0, %7 : vector<8x32xf32>
    %c0_2 = arith.constant 0 : index
    %c0_3 = arith.constant 0 : index
    %9 = vector.load %arg2[%c0_2, %c0_3] : memref<8x32xf32, #tpu.memory_space<vmem>>, vector<8x32xf32>
    tpu.vector_store %arg2[%c0_2, %c0_3], %8 {strides = array<i32>} : memref<8x32xf32, #tpu.memory_space<vmem>>, vector<8x32xf32>,
    return
  }
  func.func @transform_0(%arg0: i32) -> (i32, i32) {
    %c0_i32 = arith.constant 0 : i32
    %c0_i32_0 = arith.constant 0 : i32
    return %arg0, %c0_i32 : i32, i32
  }
  func.func @transform_1(%arg0: i32) -> (i32, i32) {
    %c0_i32 = arith.constant 0 : i32
    %c0_i32_0 = arith.constant 0 : i32
    return %arg0, %c0_i32 : i32, i32
  }
}

</mosaic_0001>

<llo_original>
// kernel: tpu_custom_call.1
$region0: #{tpu_custom_call.1}
  #allocation0 [shape = 'u32[]', space=smem, size = 0x4, offset = 0x4, fixed_abs, tag = 'smem constant byte address 0x4 - core index']
  #allocation1 [shape = 'u32[144,128]{1,0:T(1,128)}', space=vmem, size = 0x12000, scoped, tag = 'internal scratch']
  %s0 = inlined_call_operand.hbm [shape: f32[8,32], index: 0, kind: input, shape index: {}]
  %s1 = inlined_call_operand.hbm [shape: f32[8,32], index: 1, kind: output, shape index: {}]
  %s2 = sld [smem:[#allocation0]]
  $region18: #{tpu_custom_call.1} parent=0
    _
  %s4 = ssub.s32 1, %s2
  %s5 = scalar_select 0, %s4, %s2
  $region1: #{tpu_custom_call.1} parent=0
    #allocation2 [shape = 'u8[4096]{0}', space=vmem, size = 0x1000, scoped, tag = 'input window, operand 0, single buffered']
    #allocation3 [shape = 's32[1]{0}', space=sflag, size = 0x4, scoped, tag = 'scoped memory for tpu_custom_call.1']
    #allocation4 [shape = 's32[1]{0}', space=sflag, size = 0x4, scoped, tag = 'scoped memory for tpu_custom_call.1']
    #allocation5 [shape = 'u8[4096]{0}', space=vmem, size = 0x1000, scoped, tag = 'output window, operand 0, single buffered']
    %6 = vsyncpa [#allocation3], 0
    %7 = vsyncpa [#allocation4], 0
    // Predicated region
    $region2: #{tpu_custom_call.1} parent=1 // pred_check
      _
    $region3: #{tpu_custom_call.1} parent=1 // pred_check_branch
      %9 = sbr.rel (0) target = $region5
    $region4: #{tpu_custom_call.1} parent=1 // pred_region
      %s11 = ssub.s32 128, 128
      %12 = vsyncadd [#allocation3], %s11
      %s14 = sshll.u32 [#allocation2], 4
      %s15 = int_to_ptr.vmem [resolvable:$true] %s14
      %17 = dma.hbm_to_vmem [thread:$0]  %s0, 128, %s15, [#allocation3]
    $region5: #{tpu_custom_call.1} parent=1 // pred_fallthru
      _
    // Predicated region
    $region6: #{tpu_custom_call.1} parent=1 // pred_check
      _
    $region7: #{tpu_custom_call.1} parent=1 // pred_check_branch
      %19 = sbr.rel (0) target = $region9
    $region8: #{tpu_custom_call.1} parent=1 // pred_region
      %20 = dma.done [#allocation3], 128
    $region9: #{tpu_custom_call.1} parent=1 // pred_fallthru
      _
    %v21 = vld [vmem:[#allocation2] sm:$0xff]
    %v22 = vmul.f32 %v21, %v21
    %vm23 = vcmask 261120
    %v24 = vsel %vm23, %v22, 0.0
    %25 = vadd.xlane.f32.xlu0 %v24
    %v26 = vpop.xlane.xlu0 %25
    %v27 = vmax.f32 %v26, 1e-24
    %v28 = vrsqrt.pop %v27
    %v29 = vmul.f32 %v21, %v28
    %30 = vst.msk [vmem:[#allocation5] sm:$0xff] %vm23, %v29
    // Predicated region
    $region10: #{tpu_custom_call.1} parent=1 // pred_check
      _
    $region11: #{tpu_custom_call.1} parent=1 // pred_check_branch
      %32 = sbr.rel (0) target = $region13
    $region12: #{tpu_custom_call.1} parent=1 // pred_region
      %s34 = ssub.s32 128, 128
      %35 = vsyncadd [#allocation4], %s34
      %s37 = sshll.u32 [#allocation5], 4
      %s38 = int_to_ptr.vmem [resolvable:$true] %s37
      %40 = dma.vmem_to_hbm [thread:$0]  %s38, 128, %s1, [#allocation4]
    $region13: #{tpu_custom_call.1} parent=1 // pred_fallthru
      _
    // Predicated region
    $region14: #{tpu_custom_call.1} parent=1 // pred_check
      _
    $region15: #{tpu_custom_call.1} parent=1 // pred_check_branch
      %42 = sbr.rel (0) target = $region17
    $region16: #{tpu_custom_call.1} parent=1 // pred_region
      %43 = dma.done [#allocation4], 128
    $region17: #{tpu_custom_call.1} parent=1 // pred_fallthru
      _
    %44 = vsyncpa [#allocation3], 1
    %45 = vsyncpa [#allocation4], 1

</llo_original>
